<compile_context>
chip_gen: v7x
topology: tpu7x:2x2x1
jax: 0.10.0
libtpu: 0.0.40
codegen_flags: <defaults>
</compile_context>

<pallas_src>
import jax
import jax.numpy as jnp
from jax.experimental import pallas as pl
from jax.experimental.pallas import tpu as pltpu


def _cnn_kernel(x_ref, w_ref, b_ref, o_ref):
    """One tile of words.

    x_ref: (Bt, C*L)        flattened (channel, position) rows per word
    w_ref: (C*L, L_out*F)   block-Toeplitz conv weight (resident across grid)
    b_ref: (1, F)           conv bias (f32)
    o_ref: (Bt, F)          relu(max_t conv) output (f32)
    """
    n_f = b_ref.shape[1]
    n_t = w_ref.shape[1] // n_f          # L_out, static

    # Single deep matmul on the MXU: contraction depth C*L; the Toeplitz
    # weight already encodes every tap/shift, so no per-k matmuls and no
    # unaligned sublane slices.  Cast LHS to the weight dtype (bf16 path).
    y = jnp.dot(x_ref[...].astype(w_ref.dtype), w_ref[...],
                preferred_element_type=jnp.float32)          # (Bt, L_out*F)

    # Max over time.  Columns are ordered (t, f): take a running elementwise
    # max over L_out static lane slices (F divides 128 here, so each slice
    # stays inside one lane tile) -- no reshape / transpose needed.
    m = y[:, 0:n_f]
    for t in range(1, n_t):
        m = jnp.maximum(m, y[:, t * n_f:(t + 1) * n_f])      # (Bt, F)

    # Bias after the max, then ReLU.
    o_ref[...] = jnp.maximum(m + b_ref[...], 0.0).astype(o_ref.dtype)


def cnn_forward(x_ncl, weight, bias, *, compute_dtype=jnp.float32,
                block_words=512):
    """relu(max_t(Conv1d(x)))  for x in PyTorch NCL layout.

    x_ncl:  (B, C, L) float32  (B = number of words, C = char_embed)
    weight: (F, C, K) float32  (PyTorch Conv1d weight layout)
    bias:   (F,)      float32
    returns (B, F) float32
    """
    B, C, L = x_ncl.shape
    F, C2, K = weight.shape
    assert C2 == C
    L_out = L - K + 1
    assert L_out >= 1
    CL = C * L

    # ---- Fold the conv into a (C*L, L_out*F) block-Toeplitz matrix, once, on
    # the host/weight side:  W[c*L + l, t*F + f] = weight[f, c, l - t] when
    # 0 <= l - t < K, else 0.  The conv then is x.reshape(B, C*L) @ W.
    w_kcf = jnp.transpose(weight, (2, 1, 0))                 # (K, C, F)
    l_idx = jnp.arange(L)[:, None]                           # (L, 1)
    t_idx = jnp.arange(L_out)[None, :]                       # (1, L_out)
    k_idx = l_idx - t_idx                                    # (L, L_out)
    valid = (k_idx >= 0) & (k_idx < K)
    tap = jnp.where(valid, k_idx, 0)
    w_toep = w_kcf[tap]                                      # (L, L_out, C, F)
    w_toep = jnp.where(valid[:, :, None, None], w_toep, 0.0)
    w_toep = jnp.transpose(w_toep, (2, 0, 1, 3)).reshape(CL, L_out * F)
    w_toep = w_toep.astype(compute_dtype)                    # bf16 for v6e/v7x MXU

    b2 = bias.astype(jnp.float32).reshape(1, F)

    # ---- x: only a free (metadata-only) reshape; no transpose, no extra HBM pass.
    x2 = x_ncl.reshape(B, CL)

    # ---- Grid over the word axis; weight/bias stay resident, x/out tiles are
    # double-buffered by the BlockSpec pipeline.  Tile fits easily under the
    # v7x 64 MiB (32 MiB scoped) VMEM budget.
    Bt = B if B <= block_words else block_words              # block_words % 8 == 0
    nb = pl.cdiv(B, Bt)
    B_pad = nb * Bt
    if B_pad != B:
        x2 = jnp.pad(x2, ((0, B_pad - B), (0, 0)))

    out = pl.pallas_call(
        _cnn_kernel,
        out_shape=jax.ShapeDtypeStruct((B_pad, F), jnp.float32),
        grid=(nb,),
        in_specs=[
            pl.BlockSpec((Bt, CL), lambda i: (i, 0)),
            pl.BlockSpec((CL, L_out * F), lambda i: (0, 0)),  # resident weight
            pl.BlockSpec((1, F), lambda i: (0, 0)),           # resident bias
        ],
        out_specs=pl.BlockSpec((Bt, F), lambda i: (i, 0)),
        compiler_params=pltpu.CompilerParams(
            # Independent word tiles -> shard the grid across TensorCores.
            dimension_semantics=("parallel",),
            vmem_limit_bytes=32 * 1024 * 1024,
        ),
    )(x2, w_toep, b2)

    return out[:B]


if __name__ == "__main__":
    # Small shapes consistent with the module (B = number of words).
    B, char_embed, L = 8, 8, 16      # words, char embedding size, word length
    f, K = 32, 5                     # final embedding size, conv kernel size

    key = jax.random.PRNGKey(0)
    kx, kw, kb = jax.random.split(key, 3)

    weight = jax.random.normal(kw, (f, char_embed, K), jnp.float32) * 0.1
    bias = jax.random.normal(kb, (f,), jnp.float32) * 0.1
    x = jax.random.normal(kx, (B, char_embed, L), jnp.float32)   # PyTorch NCL

    # Pure-JAX reference (conv1d + max-over-time + relu).
    x_conv = jax.lax.conv_general_dilated(
        x, weight, window_strides=(1,), padding="VALID",
        dimension_numbers=("NCH", "OIH", "NCH"))
    ref = jnp.maximum(jnp.max(x_conv + bias[None, :, None], axis=2), 0.0)

    # f32 path (tight tolerance).
    out = jax.block_until_ready(cnn_forward(x, weight, bias))
    assert out.shape == (B, f)
    assert jnp.allclose(out, ref, atol=1e-4, rtol=1e-4)

    # bf16 MXU path (v6e/v7x), f32 accumulate -> looser tolerance.
    out_bf16 = jax.block_until_ready(
        cnn_forward(x, weight, bias, compute_dtype=jnp.bfloat16))
    assert out_bf16.shape == (B, f)
    assert jnp.allclose(out_bf16, ref, atol=3e-2, rtol=3e-2)

    print("KERNEL_OK")
</pallas_src>

<mosaic_0001>
module attributes {stable_mosaic.version = 11 : i64} {
  func.func @_cnn_kernel(%arg0: i32, %arg1: memref<8x128xf32, #tpu.memory_space<vmem>>, %arg2: memref<128x384xf32, #tpu.memory_space<vmem>>, %arg3: memref<1x32xf32, #tpu.memory_space<vmem>>, %arg4: memref<8x32xf32, #tpu.memory_space<vmem>>) attributes {dimension_semantics = [#tpu.dimension_semantics<parallel>], iteration_bounds = array<i64: 1>, scalar_prefetch = 0 : i64, scratch_operands = 0 : i64, tpu.core_type = #tpu.core_type<tc>, window_params = [{transform_indices = @transform_0, window_bounds = array<i64: 8, 128>}, {pipeline_mode = #tpu.pipeline_mode<synchronous>, transform_indices = @transform_1, window_bounds = array<i64: 128, 384>}, {pipeline_mode = #tpu.pipeline_mode<synchronous>, transform_indices = @transform_2, window_bounds = array<i64: 1, 32>}, {transform_indices = @transform_3, window_bounds = array<i64: 8, 32>}]} {
    %c0 = arith.constant 0 : index
    %c0_0 = arith.constant 0 : index
    %0 = vector.load %arg1[%c0, %c0_0] : memref<8x128xf32, #tpu.memory_space<vmem>>, vector<8x128xf32>
    %c0_1 = arith.constant 0 : index
    %c0_2 = arith.constant 0 : index
    %1 = vector.load %arg2[%c0_1, %c0_2] : memref<128x384xf32, #tpu.memory_space<vmem>>, vector<128x384xf32>
    %cst = arith.constant dense<0.000000e+00> : vector<8x384xf32>
    %2 = tpu.matmul %0, %1, %cst {dimension_numbers = #tpu.dot_dimension_numbers<[1], [0], [0], [1], [0, 0, 1, 1], [], []>} : vector<8x128xf32>, vector<128x384xf32>, vector<8x384xf32> -> vector<8x384xf32>
    %3 = vector.extract_strided_slice %2 {offsets = [0, 0], sizes = [8, 32], strides = [1, 1]} : vector<8x384xf32> to vector<8x32xf32>
    %4 = vector.extract_strided_slice %2 {offsets = [0, 32], sizes = [8, 32], strides = [1, 1]} : vector<8x384xf32> to vector<8x32xf32>
    %5 = arith.maximumf %3, %4 : vector<8x32xf32>
    %6 = vector.extract_strided_slice %2 {offsets = [0, 64], sizes = [8, 32], strides = [1, 1]} : vector<8x384xf32> to vector<8x32xf32>
    %7 = arith.maximumf %5, %6 : vector<8x32xf32>
    %8 = vector.extract_strided_slice %2 {offsets = [0, 96], sizes = [8, 32], strides = [1, 1]} : vector<8x384xf32> to vector<8x32xf32>
    %9 = arith.maximumf %7, %8 : vector<8x32xf32>
    %10 = vector.extract_strided_slice %2 {offsets = [0, 128], sizes = [8, 32], strides = [1, 1]} : vector<8x384xf32> to vector<8x32xf32>
    %11 = arith.maximumf %9, %10 : vector<8x32xf32>
    %12 = vector.extract_strided_slice %2 {offsets = [0, 160], sizes = [8, 32], strides = [1, 1]} : vector<8x384xf32> to vector<8x32xf32>
    %13 = arith.maximumf %11, %12 : vector<8x32xf32>
    %14 = vector.extract_strided_slice %2 {offsets = [0, 192], sizes = [8, 32], strides = [1, 1]} : vector<8x384xf32> to vector<8x32xf32>
    %15 = arith.maximumf %13, %14 : vector<8x32xf32>
    %16 = vector.extract_strided_slice %2 {offsets = [0, 224], sizes = [8, 32], strides = [1, 1]} : vector<8x384xf32> to vector<8x32xf32>
    %17 = arith.maximumf %15, %16 : vector<8x32xf32>
    %18 = vector.extract_strided_slice %2 {offsets = [0, 256], sizes = [8, 32], strides = [1, 1]} : vector<8x384xf32> to vector<8x32xf32>
    %19 = arith.maximumf %17, %18 : vector<8x32xf32>
    %20 = vector.extract_strided_slice %2 {offsets = [0, 288], sizes = [8, 32], strides = [1, 1]} : vector<8x384xf32> to vector<8x32xf32>
    %21 = arith.maximumf %19, %20 : vector<8x32xf32>
    %22 = vector.extract_strided_slice %2 {offsets = [0, 320], sizes = [8, 32], strides = [1, 1]} : vector<8x384xf32> to vector<8x32xf32>
    %23 = arith.maximumf %21, %22 : vector<8x32xf32>
    %24 = vector.extract_strided_slice %2 {offsets = [0, 352], sizes = [8, 32], strides = [1, 1]} : vector<8x384xf32> to vector<8x32xf32>
    %25 = arith.maximumf %23, %24 : vector<8x32xf32>
    %c0_3 = arith.constant 0 : index
    %c0_4 = arith.constant 0 : index
    %26 = vector.load %arg3[%c0_3, %c0_4] : memref<1x32xf32, #tpu.memory_space<vmem>>, vector<1x32xf32>
    %27 = vector.broadcast %26 : vector<1x32xf32> to vector<8x32xf32>
    %28 = arith.addf %25, %27 : vector<8x32xf32>
    %cst_5 = arith.constant 0.000000e+00 : f32
    %29 = vector.broadcast %cst_5 : f32 to vector<8x32xf32>
    %30 = arith.maximumf %28, %29 : vector<8x32xf32>
    %c0_6 = arith.constant 0 : index
    %c0_7 = arith.constant 0 : index
    %31 = vector.load %arg4[%c0_6, %c0_7] : memref<8x32xf32, #tpu.memory_space<vmem>>, vector<8x32xf32>
    tpu.vector_store %arg4[%c0_6, %c0_7], %30 {strides = array<i32>} : memref<8x32xf32, #tpu.memory_space<vmem>>, vector<8x32xf32>,
    return
  }
  func.func @transform_0(%arg0: i32) -> (i32, i32) {
    %c0_i32 = arith.constant 0 : i32
    %c0_i32_0 = arith.constant 0 : i32
    return %arg0, %c0_i32 : i32, i32
  }
  func.func @transform_1(%arg0: i32) -> (i32, i32) {
    %c0_i32 = arith.constant 0 : i32
    %c0_i32_0 = arith.constant 0 : i32
    %c0_i32_1 = arith.constant 0 : i32
    return %c0_i32, %c0_i32_0 : i32, i32
  }
  func.func @transform_2(%arg0: i32) -> (i32, i32) {
    %c0_i32 = arith.constant 0 : i32
    %c0_i32_0 = arith.constant 0 : i32
    %c0_i32_1 = arith.constant 0 : i32
    return %c0_i32, %c0_i32_0 : i32, i32
  }
  func.func @transform_3(%arg0: i32) -> (i32, i32) {
    %c0_i32 = arith.constant 0 : i32
    %c0_i32_0 = arith.constant 0 : i32
    return %arg0, %c0_i32 : i32, i32
  }
}

</mosaic_0001>

<llo_original>
// kernel: tpu_custom_call.1
$region0: #{tpu_custom_call.1}
  #allocation0 [shape = 'u32[]', space=smem, size = 0x4, offset = 0x4, fixed_abs, tag = 'smem constant byte address 0x4 - core index']
  #allocation1 [shape = 'u32[144,128]{1,0:T(1,128)}', space=vmem, size = 0x12000, scoped, tag = 'internal scratch']
  %s0 = inlined_call_operand.hbm [shape: f32[8,128], index: 0, kind: input, shape index: {}]
  %s1 = inlined_call_operand.hbm [shape: f32[128,384], index: 1, kind: input, shape index: {}]
  %s2 = inlined_call_operand.vmem [shape: f32[1,32], index: 2, kind: input, shape index: {}]
  %s3 = inlined_call_operand.hbm [shape: f32[8,32], index: 3, kind: output, shape index: {}]
  %s4 = sld [smem:[#allocation0]]
  $region30: #{tpu_custom_call.1} parent=0
    _
  %s6 = ssub.s32 1, %s4
  %s7 = scalar_select 0, %s6, %s4
  $region1: #{tpu_custom_call.1} parent=0
    #allocation2 [shape = 'u8[4096]{0}', space=vmem, size = 0x1000, scoped, tag = 'input window, operand 0, single buffered']
    #allocation3 [shape = 's32[1]{0}', space=sflag, size = 0x4, scoped, tag = 'scoped memory for tpu_custom_call.1']
    #allocation4 [shape = 's32[1]{0}', space=sflag, size = 0x4, scoped, tag = 'scoped memory for tpu_custom_call.1']
    #allocation5 [shape = 'u8[196608]{0}', space=vmem, size = 0x30000, scoped, tag = 'input window, operand 1, single buffered']
    #allocation6 [shape = 's32[1]{0}', space=sflag, size = 0x4, scoped, tag = 'scoped memory for tpu_custom_call.1']
    #allocation7 [shape = 'u8[4096]{0}', space=vmem, size = 0x1000, scoped, tag = 'output window, operand 0, single buffered']
    %8 = vsyncpa [#allocation3], 0
    %9 = vsyncpa [#allocation6], 0
    %10 = vsyncpa [#allocation4], 0
    // Predicated region
    $region2: #{tpu_custom_call.1} parent=1 // pred_check
      _
    $region3: #{tpu_custom_call.1} parent=1 // pred_check_branch
      %12 = sbr.rel (0) target = $region5
    $region4: #{tpu_custom_call.1} parent=1 // pred_region
      %s14 = ssub.s32 128, 128
      %15 = vsyncadd [#allocation3], %s14
      %s17 = sshll.u32 [#allocation2], 4
      %s18 = int_to_ptr.vmem [resolvable:$true] %s17
      %20 = dma.hbm_to_vmem [thread:$0]  %s0, 128, %s18, [#allocation3]
    $region5: #{tpu_custom_call.1} parent=1 // pred_fallthru
      _
    // Predicated region
    $region6: #{tpu_custom_call.1} parent=1 // pred_check
      _
    $region7: #{tpu_custom_call.1} parent=1 // pred_check_branch
      %22 = sbr.rel (0) target = $region9
    $region8: #{tpu_custom_call.1} parent=1 // pred_region
      %s24 = ssub.s32 6144, 6144
      %25 = vsyncadd [#allocation6], %s24
      %s26 = sshll.u32 [#allocation5], 4
      %s27 = int_to_ptr.vmem [resolvable:$true] %s26
      %32 = dma.hbm_to_vmem [thread:$0]  %s1, 6144, %s27, [#allocation6], 384, 384, 24
    $region9: #{tpu_custom_call.1} parent=1 // pred_fallthru
      _
    // Predicated region
    $region10: #{tpu_custom_call.1} parent=1 // pred_check
      _
    $region11: #{tpu_custom_call.1} parent=1 // pred_check_branch
      %34 = sbr.rel (0) target = $region13
    $region12: #{tpu_custom_call.1} parent=1 // pred_region
      _
    $region13: #{tpu_custom_call.1} parent=1 // pred_fallthru
      _
    // Predicated region
    $region14: #{tpu_custom_call.1} parent=1 // pred_check
      _
    $region15: #{tpu_custom_call.1} parent=1 // pred_check_branch
      %36 = sbr.rel (0) target = $region17
    $region16: #{tpu_custom_call.1} parent=1 // pred_region
      %37 = dma.done [#allocation3], 128
    $region17: #{tpu_custom_call.1} parent=1 // pred_fallthru
      _
    // Predicated region
    $region18: #{tpu_custom_call.1} parent=1 // pred_check
      _
    $region19: #{tpu_custom_call.1} parent=1 // pred_check_branch
      %39 = sbr.rel (0) target = $region21
    $region20: #{tpu_custom_call.1} parent=1 // pred_region
      %40 = dma.done [#allocation6], 6144
    $region21: #{tpu_custom_call.1} parent=1 // pred_fallthru
      _
    %v41 = vld [vmem:[#allocation2] sm:$0xff]
    %v42 = vld [vmem:[#allocation5] sm:$0xff]
    %v43 = vld [vmem:[#allocation5 + $0x8] sm:$0xff]
    %v44 = vld [vmem:[#allocation5 + $0x10] sm:$0xff]
    %v45 = vld [vmem:[#allocation5 + $0x18] sm:$0xff]
    %v46 = vld [vmem:[#allocation5 + $0x20] sm:$0xff]
    %v47 = vld [vmem:[#allocation5 + $0x28] sm:$0xff]
    %v48 = vld [vmem:[#allocation5 + $0x30] sm:$0xff]
    %v49 = vld [vmem:[#allocation5 + $0x38] sm:$0xff]
    %v50 = vld [vmem:[#allocation5 + $0x40] sm:$0xff]
    %v51 = vld [vmem:[#allocation5 + $0x48] sm:$0xff]
    %v52 = vld [vmem:[#allocation5 + $0x50] sm:$0xff]
    %v53 = vld [vmem:[#allocation5 + $0x58] sm:$0xff]
    %v54 = vld [vmem:[#allocation5 + $0x60] sm:$0xff]
    %v55 = vld [vmem:[#allocation5 + $0x68] sm:$0xff]
    %v56 = vld [vmem:[#allocation5 + $0x70] sm:$0xff]
    %v57 = vld [vmem:[#allocation5 + $0x78] sm:$0xff]
    %v58 = vld [vmem:[#allocation5 + $0x80] sm:$0xff]
    %v59 = vld [vmem:[#allocation5 + $0x88] sm:$0xff]
    %v60 = vld [vmem:[#allocation5 + $0x90] sm:$0xff]
    %v61 = vld [vmem:[#allocation5 + $0x98] sm:$0xff]
    %v62 = vld [vmem:[#allocation5 + $0xa0] sm:$0xff]
    %v63 = vld [vmem:[#allocation5 + $0xa8] sm:$0xff]
    %v64 = vld [vmem:[#allocation5 + $0xb0] sm:$0xff]
    %v65 = vld [vmem:[#allocation5 + $0xb8] sm:$0xff]
    %v66 = vld [vmem:[#allocation5 + $0xc0] sm:$0xff]
    %v67 = vld [vmem:[#allocation5 + $0xc8] sm:$0xff]
    %v68 = vld [vmem:[#allocation5 + $0xd0] sm:$0xff]
    %v69 = vld [vmem:[#allocation5 + $0xd8] sm:$0xff]
    %v70 = vld [vmem:[#allocation5 + $0xe0] sm:$0xff]
    %v71 = vld [vmem:[#allocation5 + $0xe8] sm:$0xff]
    %v72 = vld [vmem:[#allocation5 + $0xf0] sm:$0xff]
    %v73 = vld [vmem:[#allocation5 + $0xf8] sm:$0xff]
    %v74 = vld [vmem:[#allocation5 + $0x100] sm:$0xff]
    %v75 = vld [vmem:[#allocation5 + $0x108] sm:$0xff]
    %v76 = vld [vmem:[#allocation5 + $0x110] sm:$0xff]
    %v77 = vld [vmem:[#allocation5 + $0x118] sm:$0xff]
    %v78 = vld [vmem:[#allocation5 + $0x120] sm:$0xff]
    %v79 = vld [vmem:[#allocation5 + $0x128] sm:$0xff]
    %v80 = vld [vmem:[#allocation5 + $0x130] sm:$0xff]
    %v81 = vld [vmem:[#allocation5 + $0x138] sm:$0xff]
    %v82 = vld [vmem:[#allocation5 + $0x140] sm:$0xff]
    %v83 = vld [vmem:[#allocation5 + $0x148] sm:$0xff]
    %v84 = vld [vmem:[#allocation5 + $0x150] sm:$0xff]
    %v85 = vld [vmem:[#allocation5 + $0x158] sm:$0xff]
    %v86 = vld [vmem:[#allocation5 + $0x160] sm:$0xff]
    %v87 = vld [vmem:[#allocation5 + $0x168] sm:$0xff]
    %v88 = vld [vmem:[#allocation5 + $0x170] sm:$0xff]
    %v89 = vld [vmem:[#allocation5 + $0x178] sm:$0xff]
    %90 = vmatprep.subr.mxu0 %v43
    %91 = vmatpush1.msra.mxu0 %v42
    %92 = vmatprep.subr.mxu0 %v46
    %93 = vmatpush1.msra.mxu0 %v45
    %94 = vmatprep.subr.mxu0 %v49
    %95 = vmatpush1.msra.mxu0 %v48
    %96 = vmatprep.subr.mxu0 %v52
    %97 = vmatpush1.msra.mxu0 %v51
    %98 = vmatprep.subr.mxu0 %v55
    %99 = vmatpush1.msra.mxu0 %v54
    %100 = vmatprep.subr.mxu0 %v58
    %101 = vmatpush1.msra.mxu0 %v57
    %102 = vmatprep.subr.mxu0 %v61
    %103 = vmatpush1.msra.mxu0 %v60
    %104 = vmatprep.subr.mxu0 %v64
    %105 = vmatpush1.msra.mxu0 %v63
    %106 = vmatprep.subr.mxu0 %v67
    %107 = vmatpush1.msra.mxu0 %v66
    %108 = vmatprep.subr.mxu0 %v70
    %109 = vmatpush1.msra.mxu0 %v69
    %110 = vmatprep.subr.mxu0 %v73
    %111 = vmatpush1.msra.mxu0 %v72
    %112 = vmatprep.subr.mxu0 %v76
    %113 = vmatpush1.msra.mxu0 %v75
    %114 = vmatprep.subr.mxu0 %v79
    %115 = vmatpush1.msra.mxu0 %v78
    %116 = vmatprep.subr.mxu0 %v82
    %117 = vmatpush1.msra.mxu0 %v81
    %118 = vmatprep.subr.mxu0 %v85
    %119 = vmatpush1.msra.mxu0 %v84
    %120 = vmatprep.subr.mxu0 %v88
    %121 = vmatpush1.msra.mxu0 %v87
    %122 = vmatprep.subr.mxu0 0.0
    %123 = vmatpush1.msra.mxu0 0.0
    %124 = vmatprep.subr.mxu0 0.0
    %125 = vmatpush1.msra.mxu0 0.0
    %126 = vmatprep.subr.mxu0 0.0
    %127 = vmatpush1.msra.mxu0 0.0
    %128 = vmatprep.subr.mxu0 0.0
    %129 = vmatpush1.msra.mxu0 0.0
    %130 = vmatprep.subr.mxu0 0.0
    %131 = vmatpush1.msra.mxu0 0.0
    %132 = vmatprep.subr.mxu0 0.0
    %133 = vmatpush1.msra.mxu0 0.0
    %134 = vmatprep.subr.mxu0 0.0
    %135 = vmatpush1.msra.mxu0 0.0
    %136 = vmatprep.subr.mxu0 0.0
    %137 = vmatpush1.msra.mxu0 0.0
    %138 = vmatprep.subr.mxu0 0.0
    %139 = vmatpush1.msra.mxu0 0.0
    %140 = vmatprep.subr.mxu0 0.0
    %141 = vmatpush1.msra.mxu0 0.0
    %142 = vmatprep.subr.mxu0 0.0
    %143 = vmatpush1.msra.mxu0 0.0
    %144 = vmatprep.subr.mxu0 0.0
    %145 = vmatpush1.msra.mxu0 0.0
    %146 = vmatprep.subr.mxu0 0.0
    %147 = vmatpush1.msra.mxu0 0.0
    %148 = vmatprep.subr.mxu0 0.0
    %149 = vmatpush1.msra.mxu0 0.0
    %150 = vmatprep.subr.mxu0 0.0
    %151 = vmatpush1.msra.mxu0 0.0
    %152 = vmatprep.subr.mxu0 0.0
    %153 = vmatpush1.msra.mxu0 0.0
    %154 = vmatprep.mubr.f32.mxu0 0.0
    %155 = vmatmul.mubr.f32.gmra.mrb[0].mxu0 %v41
    %v156 = vpop.f32.mrb[0].mxu0
    %v157 = vadd.f32 0.0, %v156
    %v158 = vpop.f32.mrb[0].mxu0
    %v159 = vadd.f32 0.0, %v158
    %160 = vdwg.mxu0
    %161 = vmatprep.subr.mxu0 0.0
    %162 = vmatpush1.msra.mxu0 %v44
    %163 = vmatprep.subr.mxu0 0.0
    %164 = vmatpush1.msra.mxu0 %v47
    %165 = vmatprep.subr.mxu0 0.0
    %166 = vmatpush1.msra.mxu0 %v50
    %167 = vmatprep.subr.mxu0 0.0
    %168 = vmatpush1.msra.mxu0 %v53
    %169 = vmatprep.subr.mxu0 0.0
    %170 = vmatpush1.msra.mxu0 %v56
    %171 = vmatprep.subr.mxu0 0.0
    %172 = vmatpush1.msra.mxu0 %v59
    %173 = vmatprep.subr.mxu0 0.0
    %174 = vmatpush1.msra.mxu0 %v62
    %175 = vmatprep.subr.mxu0 0.0
    %176 = vmatpush1.msra.mxu0 %v65
    %177 = vmatprep.subr.mxu0 0.0
    %178 = vmatpush1.msra.mxu0 %v68
    %179 = vmatprep.subr.mxu0 0.0
    %180 = vmatpush1.msra.mxu0 %v71
    %181 = vmatprep.subr.mxu0 0.0
    %182 = vmatpush1.msra.mxu0 %v74
    %183 = vmatprep.subr.mxu0 0.0
    %184 = vmatpush1.msra.mxu0 %v77
    %185 = vmatprep.subr.mxu0 0.0
    %186 = vmatpush1.msra.mxu0 %v80
    %187 = vmatprep.subr.mxu0 0.0
    %188 = vmatpush1.msra.mxu0 %v83
    %189 = vmatprep.subr.mxu0 0.0
    %190 = vmatpush1.msra.mxu0 %v86
    %191 = vmatprep.subr.mxu0 0.0
    %192 = vmatpush1.msra.mxu0 %v89
    %193 = vmatprep.subr.mxu0 0.0
    %194 = vmatpush1.msra.mxu0 0.0
    %195 = vmatprep.subr.mxu0 0.0
    %196 = vmatpush1.msra.mxu0 0.0
    %197 = vmatprep.subr.mxu0 0.0
    %198 = vmatpush1.msra.mxu0 0.0
    %199 = vmatprep.subr.mxu0 0.0
    %200 = vmatpush1.msra.mxu0 0.0
    %201 = vmatprep.subr.mxu0 0.0
    %202 = vmatpush1.msra.mxu0 0.0
    %203 = vmatprep.subr.mxu0 0.0
    %204 = vmatpush1.msra.mxu0 0.0
    %205 = vmatprep.subr.mxu0 0.0
    %206 = vmatpush1.msra.mxu0 0.0
    %207 = vmatprep.subr.mxu0 0.0
    %208 = vmatpush1.msra.mxu0 0.0
    %209 = vmatprep.subr.mxu0 0.0
    %210 = vmatpush1.msra.mxu0 0.0
    %211 = vmatprep.subr.mxu0 0.0
    %212 = vmatpush1.msra.mxu0 0.0
    %213 = vmatprep.subr.mxu0 0.0
    %214 = vmatpush1.msra.mxu0 0.0
    %215 = vmatprep.subr.mxu0 0.0
    %216 = vmatpush1.msra.mxu0 0.0
    %217 = vmatprep.subr.mxu0 0.0
    %218 = vmatpush1.msra.mxu0 0.0
    %219 = vmatprep.subr.mxu0 0.0
    %220 = vmatpush1.msra.mxu0 0.0
    %221 = vmatprep.subr.mxu0 0.0
    %222 = vmatpush1.msra.mxu0 0.0
    %223 = vmatprep.subr.mxu0 0.0
    %224 = vmatpush1.msra.mxu0 0.0
    %225 = vmatprep.mubr.f32.mxu0 0.0
    %226 = vmatmul.mubr.f32.gmra.mrb[0].mxu0 %v41
    %v227 = vpop.f32.mrb[0].mxu0
    %v228 = vadd.f32 0.0, %v227
    %v229 = vpop.f32.mrb[0].mxu0
    %230 = vdwg.mxu0
    %232 = vrot.lane.b32.xlu0 %v157, 96
    %v233 = vpop.permute.xlu0 %232
    %v235 = vmax.f32 %v157, %v233
    %236 = vrot.lane.b32.xlu0 %v157, 64
    %v237 = vpop.permute.xlu0 %236
    %v239 = vmax.f32 %v235, %v237
    %240 = vrot.lane.b32.xlu0 %v157, 32
    %v241 = vpop.permute.xlu0 %240
    %v243 = vmax.f32 %v239, %v241
    %v244 = vmax.f32 %v243, %v159
    %246 = vrot.lane.b32.xlu0 %v159, 96
    %v247 = vpop.permute.xlu0 %246
    %v249 = vmax.f32 %v244, %v247
    %250 = vrot.lane.b32.xlu0 %v159, 64
    %v251 = vpop.permute.xlu0 %250
    %v253 = vmax.f32 %v249, %v251
    %254 = vrot.lane.b32.xlu0 %v159, 32
    %v255 = vpop.permute.xlu0 %254
    %v257 = vmax.f32 %v253, %v255
    %v258 = vmax.f32 %v257, %v228
    %260 = vrot.lane.b32.xlu0 %v228, 96
    %v261 = vpop.permute.xlu0 %260
    %v263 = vmax.f32 %v258, %v261
    %264 = vrot.lane.b32.xlu0 %v228, 64
    %v265 = vpop.permute.xlu0 %264
    %v267 = vmax.f32 %v263, %v265
    %268 = vrot.lane.b32.xlu0 %v228, 32
    %v269 = vpop.permute.xlu0 %268
    %v271 = vmax.f32 %v267, %v269
    %v272 = vld [vmem:[%s2] sm:$0x1]
    %v274 = vlaneseq
    %v275 = vshrl.u32 %v274, 7
    %v276 = vsub.s32 0, %v275
    %v277 = vrot.slane %v272, %v276
    %v279 = vadd.f32 %v271, %v277
    %v280 = vmax.f32 %v279, 0.0
    %vm281 = vcmask 261120
    %282 = vst.msk [vmem:[#allocation7] sm:$0xff] %vm281, %v280
    // Predicated region
    $region22: #{tpu_custom_call.1} parent=1 // pred_check
      _
    $region23: #{tpu_custom_call.1} parent=1 // pred_check_branch
      %284 = sbr.rel (0) target = $region25
    $region24: #{tpu_custom_call.1} parent=1 // pred_region
      %s286 = ssub.s32 128, 128
      %287 = vsyncadd [#allocation4], %s286
      %s289 = sshll.u32 [#allocation7], 4
      %s290 = int_to_ptr.vmem [resolvable:$true] %s289
      %292 = dma.vmem_to_hbm [thread:$0]  %s290, 128, %s3, [#allocation4]
    $region25: #{tpu_custom_call.1} parent=1 // pred_fallthru
      _
    // Predicated region
    $region26: #{tpu_custom_call.1} parent=1 // pred_check
      _
    $region27: #{tpu_custom_call.1} parent=1 // pred_check_branch
      %294 = sbr.rel (0) target = $region29
    $region28: #{tpu_custom_call.1} parent=1 // pred_region
      %295 = dma.done [#allocation4], 128
    $region29: #{tpu_custom_call.1} parent=1 // pred_fallthru
      _
    %296 = vsyncpa [#allocation3], 1
    %297 = vsyncpa [#allocation6], 1
    %298 = vsyncpa [#allocation4], 1

</llo_original>
